<compile_context>
chip_gen: v6e
topology: v6e:2x2x1
jax: 0.10.0
libtpu: 0.0.40
codegen_flags: <defaults>
</compile_context>

<pallas_src>
import functools

import jax
import jax.numpy as jnp
from jax.experimental import pallas as pl
from jax.experimental.pallas import tpu as pltpu

# Column layout of the single packed output slab (G, LANES).
_COL_PRED = 0
_COL_CORRECT = 1
_COL_TARGET = 2
_COL_ACTUAL = 3
_COL_OPTIMAL = 4
_COL_ACC = 5
_LANES = 128  # lane-dense output slab width


# ----------------------------- fused Pallas kernel -----------------------------
def _metrics_kernel(labels_are_2d, has_runtimes, *refs):
    """argmax / correct / accuracy (+ optional runtime gathers) in one body."""
    if has_runtimes:
        logits_ref, labels_ref, runtimes_ref, out_ref = refs
    else:
        logits_ref, labels_ref, out_ref = refs
        runtimes_ref = None

    f32 = jnp.float32
    g, c = logits_ref.shape
    lanes = out_ref.shape[1]

    logits = logits_ref[...].astype(f32)                                  # (G, C)
    # Lane-index grid reused for argmax and the one-hot gathers.
    col = jax.lax.broadcasted_iota(jnp.int32, (g, c), 1).astype(f32)      # (G, C)

    def first_argmax(x):
        # First-index argmax along the class axis; comparison kept strictly f32.
        mx = jnp.max(x, axis=-1, keepdims=True)
        return jnp.min(jnp.where(x == mx, col, f32(c)), axis=-1, keepdims=True)

    pred = first_argmax(logits)                                           # (G, 1)

    if labels_are_2d:
        tgt = first_argmax(labels_ref[...].astype(f32))                   # (G, 1)
    else:
        tgt = labels_ref[...].astype(f32)                                 # (G, 1)

    correct = (pred == tgt).astype(f32)                                   # (G, 1)
    acc = jnp.sum(correct, axis=0, keepdims=True) * f32(1.0 / g)          # (1, 1)
    acc_b = jnp.broadcast_to(acc, (g, 1))

    if has_runtimes:
        rt = runtimes_ref[...].astype(f32)                                # (G, C)
        # gather(runtimes, index=pred/targets) as one-hot masked lane sums.
        actual = jnp.sum(jnp.where(col == pred, rt, 0.0), axis=-1, keepdims=True)
        optimal = jnp.sum(jnp.where(col == tgt, rt, 0.0), axis=-1, keepdims=True)
    else:
        actual = jnp.zeros((g, 1), f32)
        optimal = jnp.zeros((g, 1), f32)

    pad = jnp.zeros((g, lanes - 6), f32)
    # One lane-dense slab -> single unmasked store and one writeback DMA.
    out_ref[...] = jnp.concatenate(
        [pred, correct, tgt, actual, optimal, acc_b, pad], axis=1)


# ----------------------------- wrapper --------------------------------------------
def metrics_forward(logits, labels, runtimes=None):
    """Mirrors Metrics.forward: returns (accuracy, correct_preds, targets[, actual, optimal])."""
    g, c = logits.shape

    if labels.ndim == 2:
        labels_are_2d = True
        labels_arg = labels.astype(jnp.float32)                           # (G, C)
    elif labels.ndim == 1:
        labels_are_2d = False
        labels_arg = labels.astype(jnp.float32).reshape(g, 1)             # (G, 1)
    else:
        raise ValueError(
            f"labels={labels.shape} tensor is is neither 1 nor 2-dimensional. :/")

    has_runtimes = runtimes is not None
    args = [logits.astype(jnp.float32), labels_arg]
    if has_runtimes:
        assert runtimes.shape == logits.shape, (
            f"We need to have a runtime for each sample and every possible label!"
            f"runtimes={runtimes.shape}, logits={logits.shape}.")
        args.append(runtimes.astype(jnp.float32))

    vmem = pl.BlockSpec(memory_space=pltpu.MemorySpace.VMEM)
    out = pl.pallas_call(
        functools.partial(_metrics_kernel, labels_are_2d, has_runtimes),
        out_shape=jax.ShapeDtypeStruct((g, _LANES), jnp.float32),
        in_specs=[vmem] * len(args),
        out_specs=vmem,
    )(*args)

    accuracy = out[0, _COL_ACC]
    correct_preds = out[:, _COL_CORRECT]
    targets = out[:, _COL_TARGET].astype(jnp.int32)
    ret = (accuracy, correct_preds, targets)
    if has_runtimes:
        actual = out[:, _COL_ACTUAL]
        optimal = out[:, _COL_OPTIMAL]
        ret = ret + (actual, optimal)
    return ret


# ----------------------------- main ------------------------------------------------
if __name__ == "__main__":
    key = jax.random.PRNGKey(0)
    k_logits, k_lab1, k_lab2, k_rt = jax.random.split(key, 4)

    G, C = 8, 4
    logits = jax.random.normal(k_logits, (G, C), jnp.float32)
    labels_1d = jax.random.randint(k_lab1, (G,), 0, C, dtype=jnp.int32)
    labels_2d = jax.nn.one_hot(
        jax.random.randint(k_lab2, (G,), 0, C), C, dtype=jnp.float32)
    runtimes = jax.random.uniform(k_rt, (G, C), jnp.float32)

    # Path 1: 1-D integer labels + runtimes.
    acc, correct, tgt, actual, optimal = metrics_forward(logits, labels_1d, runtimes)
    # Path 2: 2-D one-hot labels, no runtimes.
    acc2, correct2, tgt2 = metrics_forward(logits, labels_2d)
    jax.block_until_ready((acc, correct, tgt, actual, optimal, acc2, correct2, tgt2))

    # Pure-JAX reference checks (random floats -> no argmax ties).
    pred_ref = jnp.argmax(logits, axis=1)
    correct_ref = (pred_ref == labels_1d).astype(jnp.float32)
    assert jnp.allclose(acc, jnp.mean(correct_ref))
    assert jnp.array_equal(tgt, labels_1d)
    assert jnp.array_equal(correct, correct_ref)
    assert jnp.allclose(actual, jnp.take_along_axis(runtimes, pred_ref[:, None], axis=1)[:, 0])
    assert jnp.allclose(optimal, jnp.take_along_axis(runtimes, labels_1d[:, None], axis=1)[:, 0])

    tgt2_ref = jnp.argmax(labels_2d, axis=1).astype(jnp.int32)
    correct2_ref = (pred_ref == tgt2_ref).astype(jnp.float32)
    assert jnp.array_equal(tgt2, tgt2_ref)
    assert jnp.array_equal(correct2, correct2_ref)
    assert jnp.allclose(acc2, jnp.mean(correct2_ref))

    print("KERNEL_OK")
</pallas_src>

<mosaic_0001>
module attributes {stable_mosaic.version = 11 : i64} {
  func.func @_metrics_kernel(%arg0: memref<8x4xf32, #tpu.memory_space<vmem>>, %arg1: memref<8x1xf32, #tpu.memory_space<vmem>>, %arg2: memref<8x4xf32, #tpu.memory_space<vmem>>, %arg3: memref<8x128xf32, #tpu.memory_space<vmem>>) attributes {dimension_semantics = [], scalar_prefetch = 0 : i64, scratch_operands = 0 : i64, tpu.core_type = #tpu.core_type<tc>} {
    %c0 = arith.constant 0 : index
    %c0_0 = arith.constant 0 : index
    %0 = vector.load %arg0[%c0, %c0_0] : memref<8x4xf32, #tpu.memory_space<vmem>>, vector<8x4xf32>
    %1 = tpu.iota {dimensions = array<i32: 1>} : vector<8x4xi32>
    %2 = arith.sitofp %1 : vector<8x4xi32> to vector<8x4xf32>
    %cst = arith.constant dense<0xFF800000> : vector<8xf32>
    %3 = vector.multi_reduction <maximumf>, %0, %cst [1] : vector<8x4xf32> to vector<8xf32>
    %4 = vector.shape_cast %3 : vector<8xf32> to vector<8x1xf32>
    %5 = vector.broadcast %4 : vector<8x1xf32> to vector<8x4xf32>
    %6 = arith.cmpf oeq, %0, %5 : vector<8x4xf32>
    %cst_1 = arith.constant 4.000000e+00 : f32
    %7 = vector.broadcast %cst_1 : f32 to vector<8x4xf32>
    %8 = arith.select %6, %2, %7 : vector<8x4xi1>, vector<8x4xf32>
    %cst_2 = arith.constant dense<0x7F800000> : vector<8xf32>
    %9 = vector.multi_reduction <minimumf>, %8, %cst_2 [1] : vector<8x4xf32> to vector<8xf32>
    %10 = vector.shape_cast %9 : vector<8xf32> to vector<8x1xf32>
    %c0_3 = arith.constant 0 : index
    %c0_4 = arith.constant 0 : index
    %11 = vector.load %arg1[%c0_3, %c0_4] : memref<8x1xf32, #tpu.memory_space<vmem>>, vector<8x1xf32>
    %12 = arith.cmpf oeq, %10, %11 : vector<8x1xf32>
    %13 = arith.extui %12 : vector<8x1xi1> to vector<8x1xi32>
    %14 = arith.sitofp %13 : vector<8x1xi32> to vector<8x1xf32>
    %cst_5 = arith.constant dense<0.000000e+00> : vector<1xf32>
    %15 = vector.multi_reduction <add>, %14, %cst_5 [0] : vector<8x1xf32> to vector<1xf32>
    %16 = vector.shape_cast %15 : vector<1xf32> to vector<1x1xf32>
    %cst_6 = arith.constant 1.250000e-01 : f32
    %17 = vector.broadcast %cst_6 : f32 to vector<1x1xf32>
    %18 = arith.mulf %16, %17 : vector<1x1xf32>
    %19 = vector.shape_cast %18 : vector<1x1xf32> to vector<1x1xf32>
    %20 = vector.broadcast %19 : vector<1x1xf32> to vector<8x1xf32>
    %c0_7 = arith.constant 0 : index
    %c0_8 = arith.constant 0 : index
    %21 = vector.load %arg2[%c0_7, %c0_8] : memref<8x4xf32, #tpu.memory_space<vmem>>, vector<8x4xf32>
    %22 = vector.broadcast %10 : vector<8x1xf32> to vector<8x4xf32>
    %23 = arith.cmpf oeq, %2, %22 : vector<8x4xf32>
    %cst_9 = arith.constant 0.000000e+00 : f32
    %24 = vector.broadcast %cst_9 : f32 to vector<8x4xf32>
    %25 = arith.select %23, %21, %24 : vector<8x4xi1>, vector<8x4xf32>
    %cst_10 = arith.constant dense<0.000000e+00> : vector<8xf32>
    %26 = vector.multi_reduction <add>, %25, %cst_10 [1] : vector<8x4xf32> to vector<8xf32>
    %27 = vector.shape_cast %26 : vector<8xf32> to vector<8x1xf32>
    %28 = vector.broadcast %11 : vector<8x1xf32> to vector<8x4xf32>
    %29 = arith.cmpf oeq, %2, %28 : vector<8x4xf32>
    %cst_11 = arith.constant 0.000000e+00 : f32
    %30 = vector.broadcast %cst_11 : f32 to vector<8x4xf32>
    %31 = arith.select %29, %21, %30 : vector<8x4xi1>, vector<8x4xf32>
    %cst_12 = arith.constant dense<0.000000e+00> : vector<8xf32>
    %32 = vector.multi_reduction <add>, %31, %cst_12 [1] : vector<8x4xf32> to vector<8xf32>
    %33 = vector.shape_cast %32 : vector<8xf32> to vector<8x1xf32>
    %cst_13 = arith.constant 0.000000e+00 : f32
    %34 = vector.broadcast %cst_13 : f32 to vector<8x122xf32>
    %35 = tpu.concatenate %10, %14, %11, %27, %33, %20, %34 in 1 : vector<8x1xf32>, vector<8x1xf32>, vector<8x1xf32>, vector<8x1xf32>, vector<8x1xf32>, vector<8x1xf32>, vector<8x122xf32> -> vector<8x128xf32>
    %c0_14 = arith.constant 0 : index
    %c0_15 = arith.constant 0 : index
    %36 = vector.load %arg3[%c0_14, %c0_15] : memref<8x128xf32, #tpu.memory_space<vmem>>, vector<8x128xf32>
    tpu.vector_store %arg3[%c0_14, %c0_15], %35 {strides = array<i32>} : memref<8x128xf32, #tpu.memory_space<vmem>>, vector<8x128xf32>,
    return
  }
}

</mosaic_0001>

<llo_original>
// kernel: tpu_custom_call.1
$region0: #{tpu_custom_call.1}
  #allocation0 [shape = 'u32[]', space=smem, size = 0x4, offset = 0x4, fixed_abs, tag = 'smem constant byte address 0x4 - core index']
  #allocation1 [shape = 'u32[144,128]{1,0:T(1,128)}', space=vmem, size = 0x12000, scoped, tag = 'internal scratch']
  %s0 = inlined_call_operand.vmem [shape: f32[8,4], index: 0, kind: input, shape index: {}]
  %s1 = inlined_call_operand.vmem [shape: f32[8,1], index: 1, kind: input, shape index: {}]
  %s2 = inlined_call_operand.vmem [shape: f32[8,4], index: 2, kind: input, shape index: {}]
  %s3 = inlined_call_operand.hbm [shape: f32[8,128], index: 3, kind: output, shape index: {}]
  %s4 = sld [smem:[#allocation0]]
  $region22: #{tpu_custom_call.1} parent=0
    _
  %s6 = ssub.s32 1, %s4
  %s7 = scalar_select 0, %s6, %s4
  $region1: #{tpu_custom_call.1} parent=0
    #allocation2 [shape = 'u8[4096]{0}', space=vmem, size = 0x1000, scoped, tag = 'output window, operand 0, single buffered']
    #allocation3 [shape = 's32[1]{0}', space=sflag, size = 0x4, scoped, tag = 'scoped memory for tpu_custom_call.1']
    %8 = vsyncpa [#allocation3], 0
    // Predicated region
    $region2: #{tpu_custom_call.1} parent=1 // pred_check
      _
    $region3: #{tpu_custom_call.1} parent=1 // pred_check_branch
      %10 = sbr.rel (0) target = $region5
    $region4: #{tpu_custom_call.1} parent=1 // pred_region
      _
    $region5: #{tpu_custom_call.1} parent=1 // pred_fallthru
      _
    // Predicated region
    $region6: #{tpu_custom_call.1} parent=1 // pred_check
      _
    $region7: #{tpu_custom_call.1} parent=1 // pred_check_branch
      %12 = sbr.rel (0) target = $region9
    $region8: #{tpu_custom_call.1} parent=1 // pred_region
      _
    $region9: #{tpu_custom_call.1} parent=1 // pred_fallthru
      _
    // Predicated region
    $region10: #{tpu_custom_call.1} parent=1 // pred_check
      _
    $region11: #{tpu_custom_call.1} parent=1 // pred_check_branch
      %14 = sbr.rel (0) target = $region13
    $region12: #{tpu_custom_call.1} parent=1 // pred_region
      _
    $region13: #{tpu_custom_call.1} parent=1 // pred_fallthru
      _
    %v15 = vld [vmem:[%s0] sm:$0xff]
    %v16 = vlaneseq
    %v17 = vand.u32 %v16, 127
    %v18 = vcvt.s32.f32 %v17
    %vm19 = vcmask 31744
    %v20 = vsel %vm19, %v15, -inf
    %21 = vmax.xlane.f32.xlu0 %v20
    %v22 = vpop.xlane.xlu0 %21
    %vm23 = vcmp.eq.f32.partialorder %v15, %v22
    %v24 = vsel %vm23, %v18, 4.0
    %v25 = vsel %vm19, %v24, inf
    %26 = vmin.xlane.f32.xlu0 %v25
    %v27 = vpop.xlane.xlu0 %26
    %v28 = vld [vmem:[%s1] sm:$0xff]
    %vm29 = vcmp.eq.f32.partialorder %v27, %v28
    %v30 = vsel %vm29, 1, 0
    %v31 = vcvt.s32.f32 %v30
    %vm32 = vcmask 7168
    %v33 = vsel %vm32, %v31, 0.0
    %v34 = vrot.slane %v33, 4
    %v35 = vadd.f32 %v33, %v34
    %v36 = vrot.slane %v35, 2
    %v37 = vadd.f32 %v35, %v36
    %v38 = vrot.slane %v37, 1
    %v39 = vadd.f32 %v37, %v38
    %v40 = vmul.f32 %v39, 0.125
    %v41 = vld [vmem:[%s2] sm:$0xff]
    %vm42 = vcmp.eq.f32.partialorder %v18, %v27
    %v43 = vsel %vm42, %v41, 0.0
    %v44 = vsel %vm19, %v43, 0.0
    %45 = vadd.xlane.f32.xlu0 %v44
    %v46 = vpop.xlane.xlu0 %45
    %48 = vset.pattern.permute.xlu0 0
    %49 = vperm.xlu0 %48, %v28
    %v50 = vpop.permute.xlu0 %49
    %vm52 = vcmp.eq.f32.partialorder %v18, %v50
    %v53 = vsel %vm52, %v41, 0.0
    %v54 = vsel %vm19, %v53, 0.0
    %55 = vadd.xlane.f32.xlu0 %v54
    %v56 = vpop.xlane.xlu0 %55
    %58 = vrot.lane.b32.xlu0 %v31, 1
    %v59 = vpop.permute.xlu0 %58
    %61 = vrot.lane.b32.xlu0 %v28, 2
    %v62 = vpop.permute.xlu0 %61
    %65 = vrot.lane.b32.xlu0 %v40, 5
    %v66 = vpop.permute.xlu0 %65
    %v68 = vsel %vm32, %v27, %v59
    %vm69 = vcmask 15360
    %v70 = vsel %vm69, %v68, %v62
    %vm71 = vcmask 23552
    %v72 = vsel %vm71, %v70, %v46
    %v73 = vsel %vm19, %v72, %v56
    %vm74 = vcmask 39936
    %v75 = vsel %vm74, %v73, %v66
    %vm76 = vcmask 48128
    %v77 = vsel %vm76, %v75, 0.0
    %78 = vst [vmem:[#allocation2] sm:$0xff] %v77
    // Predicated region
    $region14: #{tpu_custom_call.1} parent=1 // pred_check
      _
    $region15: #{tpu_custom_call.1} parent=1 // pred_check_branch
      %80 = sbr.rel (0) target = $region17
    $region16: #{tpu_custom_call.1} parent=1 // pred_region
      %s82 = ssub.s32 128, 128
      %83 = vsyncadd [#allocation3], %s82
      %s85 = sshll.u32 [#allocation2], 4
      %s86 = int_to_ptr.vmem [resolvable:$true] %s85
      %88 = dma.vmem_to_hbm [thread:$0]  %s86, 128, %s3, [#allocation3]
    $region17: #{tpu_custom_call.1} parent=1 // pred_fallthru
      _
    // Predicated region
    $region18: #{tpu_custom_call.1} parent=1 // pred_check
      _
    $region19: #{tpu_custom_call.1} parent=1 // pred_check_branch
      %90 = sbr.rel (0) target = $region21
    $region20: #{tpu_custom_call.1} parent=1 // pred_region
      %91 = dma.done [#allocation3], 128
    $region21: #{tpu_custom_call.1} parent=1 // pred_fallthru
      _
    %92 = vsyncpa [#allocation3], 1

</llo_original>
